<compile_context>
chip_gen: v7x
topology: tpu7x:2x2x1
jax: 0.10.0
libtpu: 0.0.40
codegen_flags: <defaults>
</compile_context>

<pallas_src>
import jax
import jax.numpy as jnp
from jax.experimental import pallas as pl
from jax.experimental.pallas import tpu as pltpu


# --------------------------------------------------------------------------
# Shared helpers
# --------------------------------------------------------------------------

_LANE = 128
_MAX_COLS = 8192                 # lane-dense slab width cap (elements)
_DEFAULT_BLOCK_BYTES = 8 << 20   # 8 MiB blocks -> 2 in + 2 out buffers = 32 MiB
_DEFAULT_VMEM_LIMIT = 48 << 20   # explicit scoped-VMEM limit, safe on v5e/v6e/v7x
_MIN_ROW_BLOCKS = 4              # keep >=4 blocks on big slabs (v7x megacore)


def _itemsize(dtype):
    return jnp.dtype(dtype).itemsize


def _row_unit(itemsize):
    # Sublane packing: 8 rows/vreg for 32-bit, 16 for 16-bit, 32 for 8-bit.
    return 8 * max(1, 4 // max(1, itemsize))


def _pick_slab_shape(total, row_unit, max_cols=_MAX_COLS):
    """Factor `total` into (rows, cols) with a wide, preferably 128-aligned cols.

    A row-major reshape to this shape is metadata-only.  Lane-dense (wide)
    output width turns masked vst.msk edge stores into full-width vst -- the
    biggest single measured lever for copy-like kernels.
    """
    hi = min(max_cols, total)
    aligned = [c for c in range(_LANE, hi + 1, _LANE) if total % c == 0]
    if aligned:
        tall = [c for c in aligned if total // c >= row_unit]
        cols = max(tall) if tall else max(aligned)
        return total // cols, cols
    # No divisor that is a multiple of 128: take the widest divisor <= max_cols.
    # A block whose last dim equals the full array dim is always legal, and a
    # wide last dim beats the raw (n, f) fallback when f is small.
    for cols in range(hi, 0, -1):
        if total % cols == 0:
            return total // cols, cols
    return 1, total


# --------------------------------------------------------------------------
# Path A: direct HBM -> HBM DMA copy (no VMEM staging)
# --------------------------------------------------------------------------

def _dma_flatten(x2, *, max_inflight=8):
    """Physically copy the (n, f) slab with chunked HBM->HBM DMAs."""
    n, f = x2.shape
    itemsize = _itemsize(x2.dtype)
    chunks = max(1, min(max_inflight, n))
    bounds = [(i * n) // chunks for i in range(chunks + 1)]
    spans = [(bounds[i], bounds[i + 1] - bounds[i])
             for i in range(chunks) if bounds[i + 1] > bounds[i]]
    nsp = len(spans)

    def kernel(x_hbm, o_hbm, sems):
        copies = [
            pltpu.make_async_copy(
                x_hbm.at[pl.ds(start, size), :],
                o_hbm.at[pl.ds(start, size), :],
                sems.at[k],
            )
            for k, (start, size) in enumerate(spans)
        ]
        for c in copies:   # issue all chunk DMAs (<= max_inflight in flight)
            c.start()
        for c in copies:   # drain
            c.wait()

    return pl.pallas_call(
        kernel,
        out_shape=jax.ShapeDtypeStruct((n, f), x2.dtype),
        in_specs=[pl.BlockSpec(memory_space=pl.ANY)],
        out_specs=pl.BlockSpec(memory_space=pl.ANY),
        scratch_shapes=[pltpu.SemaphoreType.DMA((nsp,))],
        cost_estimate=pl.CostEstimate(
            flops=0, transcendentals=0, bytes_accessed=2 * n * f * itemsize),
    )(x2)


# --------------------------------------------------------------------------
# Path B: lane-dense VMEM streaming copy (2-D grid)
# --------------------------------------------------------------------------

def _copy_kernel(x_ref, o_ref):
    o_ref[...] = x_ref[...]   # identity copy of the current VMEM block


def _pick_col_block(cols, itemsize, block_bytes, row_unit):
    # Block the column dim too when even a row_unit-tall block would blow the
    # per-block byte budget (very wide ragged fallback slabs).
    if row_unit * cols * itemsize <= block_bytes or cols <= _LANE:
        return cols
    bc = (block_bytes // (row_unit * itemsize)) // _LANE * _LANE
    bc = max(_LANE, bc)
    return cols if bc >= cols else bc


def _pick_row_block(rows, bc, itemsize, block_bytes, row_unit):
    bytes_per_row = bc * itemsize
    tr = max(1, block_bytes // bytes_per_row)
    # Keep >= _MIN_ROW_BLOCKS blocks when there is >=1 MiB of work so the
    # "parallel" grid actually shards across v7x's two TensorCores.
    if rows * bytes_per_row >= (1 << 20) and rows >= _MIN_ROW_BLOCKS * row_unit:
        tr = min(tr, -(-rows // _MIN_ROW_BLOCKS))
    if tr >= rows or rows <= row_unit:
        return rows
    br = max(row_unit, (tr // row_unit) * row_unit)
    return min(br, (rows // row_unit) * row_unit)


def _streamed_flatten(x2, *, block_bytes=_DEFAULT_BLOCK_BYTES,
                      vmem_limit_bytes=_DEFAULT_VMEM_LIMIT):
    n, f = x2.shape
    total = n * f
    itemsize = _itemsize(x2.dtype)
    row_unit = _row_unit(itemsize)

    rows, cols = _pick_slab_shape(total, row_unit)
    slab = jnp.reshape(x2, (rows, cols))          # metadata-only, row-major

    bc = _pick_col_block(cols, itemsize, block_bytes, row_unit)
    br = _pick_row_block(rows, bc, itemsize, block_bytes, row_unit)
    grid = (pl.cdiv(rows, br), pl.cdiv(cols, bc))

    out = pl.pallas_call(
        _copy_kernel,
        out_shape=jax.ShapeDtypeStruct((rows, cols), slab.dtype),
        grid=grid,
        in_specs=[pl.BlockSpec((br, bc), lambda i, j: (i, j))],
        out_specs=pl.BlockSpec((br, bc), lambda i, j: (i, j)),
        cost_estimate=pl.CostEstimate(
            flops=0, transcendentals=0, bytes_accessed=2 * total * itemsize),
        compiler_params=pltpu.CompilerParams(
            dimension_semantics=("parallel", "parallel"),
            vmem_limit_bytes=vmem_limit_bytes,
        ),
    )(slab)
    return jnp.reshape(out, (n, f))


# --------------------------------------------------------------------------
# Public wrapper (matches torch Flatten.forward semantics)
# --------------------------------------------------------------------------

def flatten_pallas(x, full=False, *, materialize=False, method="dma",
                   donate=False, block_bytes=_DEFAULT_BLOCK_BYTES,
                   vmem_limit_bytes=_DEFAULT_VMEM_LIMIT):
    """Pallas/JAX equivalent of Flatten.forward.

    full=False -> shape (N, prod(rest));  full=True -> shape (N*prod(rest),).

    Default path is metadata-only (zero HBM traffic), matching torch's .view().
    materialize=True forces a physical copy ("dma": HBM->HBM DMA, "stream":
    VMEM streaming copy).  donate=True short-circuits back to the metadata
    view -- rewriting identical bytes into a donated buffer is pure waste.
    """
    n = x.shape[0] if x.ndim >= 1 else 1
    f = 1
    for d in x.shape[1:]:
        f *= d

    x2 = jnp.reshape(x, (n, f))   # metadata-only, row-major == torch .view()
    if materialize and not donate and n * f > 0:
        if method == "dma":
            x2 = _dma_flatten(x2)
        else:
            x2 = _streamed_flatten(x2, block_bytes=block_bytes,
                                   vmem_limit_bytes=vmem_limit_bytes)
    return jnp.reshape(x2, (n * f,)) if full else x2


class Flatten:
    """Drop-in stand-in for the PyTorch module."""

    def __init__(self, full=False):
        self.full = full

    def __call__(self, x, **kw):
        return flatten_pallas(x, self.full, **kw)


if __name__ == "__main__":
    key = jax.random.PRNGKey(0)
    # Small NCHW input consistent with an MNIST-style conv feature map.
    x = jax.random.normal(key, (2, 4, 16, 16), dtype=jnp.float32)
    ref2 = jnp.reshape(x, (x.shape[0], -1))
    ref1 = jnp.reshape(x, (-1,))

    # Hot path: metadata-only flatten (no kernel; matches torch .view()).
    y = jax.block_until_ready(flatten_pallas(x, full=False))
    assert y.shape == (2, 1024) and jnp.array_equal(y, ref2)
    y_full = jax.block_until_ready(flatten_pallas(x, full=True))
    assert y_full.shape == (2048,) and jnp.array_equal(y_full, ref1)

    # Materialized path A: direct HBM->HBM DMA copy.
    ym = jax.block_until_ready(
        flatten_pallas(x, full=False, materialize=True, method="dma"))
    assert ym.shape == (2, 1024) and jnp.array_equal(ym, ref2)
    ym_full = jax.block_until_ready(
        flatten_pallas(x, full=True, materialize=True, method="dma"))
    assert ym_full.shape == (2048,) and jnp.array_equal(ym_full, ref1)

    # Materialized path B: lane-dense VMEM streaming copy (2-D grid).
    ys = jax.block_until_ready(
        flatten_pallas(x, full=False, materialize=True, method="stream"))
    assert jnp.array_equal(ys, ref2)

    # Fallback check: element count not a multiple of 128 (wide-divisor slab).
    x_odd = jax.random.normal(jax.random.PRNGKey(0), (2, 3, 5, 7),
                              dtype=jnp.float32)
    ref_odd = jnp.reshape(x_odd, (2, -1))
    yo_s = jax.block_until_ready(
        flatten_pallas(x_odd, materialize=True, method="stream"))
    assert jnp.array_equal(yo_s, ref_odd)
    yo_d = jax.block_until_ready(
        flatten_pallas(x_odd, materialize=True, method="dma"))
    assert jnp.array_equal(yo_d, ref_odd)

    # donate=True short-circuits to the metadata view (no kernel launch).
    yd = jax.block_until_ready(flatten_pallas(x, materialize=True, donate=True))
    assert jnp.array_equal(yd, ref2)

    print("KERNEL_OK")
</pallas_src>

<mosaic_0001>
module attributes {stable_mosaic.version = 11 : i64} {
  func.func @kernel(%arg0: memref<2x1024xf32, #tpu.memory_space<any>>, %arg1: memref<2x1024xf32, #tpu.memory_space<any>>, %arg2: memref<2x!tpu.dma_semaphore, #tpu.memory_space<semaphore_mem>>) attributes {dimension_semantics = [], scalar_prefetch = 0 : i64, scratch_operands = 1 : i64, tpu.core_type = #tpu.core_type<tc>} {
    %c0_i32 = arith.constant 0 : i32
    %c0_i32_0 = arith.constant 0 : i32
    %c0_i32_1 = arith.constant 0 : i32
    %0 = tpu.memref_slice %arg0[%c0_i32_0, %c0_i32_1] : memref<2x1024xf32, #tpu.memory_space<any>> -> memref<1x1024xf32, #tpu.memory_space<any>>
    %c0_i32_2 = arith.constant 0 : i32
    %c0_i32_3 = arith.constant 0 : i32
    %1 = tpu.memref_slice %arg1[%c0_i32_2, %c0_i32_3] : memref<2x1024xf32, #tpu.memory_space<any>> -> memref<1x1024xf32, #tpu.memory_space<any>>
    %2 = tpu.memref_slice %arg2[%c0_i32] : memref<2x!tpu.dma_semaphore, #tpu.memory_space<semaphore_mem>> -> memref<1x!tpu.dma_semaphore, #tpu.memory_space<semaphore_mem>>
    %3 = tpu.memref_squeeze %2 : memref<1x!tpu.dma_semaphore, #tpu.memory_space<semaphore_mem>> -> memref<!tpu.dma_semaphore, #tpu.memory_space<semaphore_mem>>
    tpu.enqueue_dma source(%0 : memref<1x1024xf32, #tpu.memory_space<any>>) target(%1 : memref<1x1024xf32, #tpu.memory_space<any>>) target_semaphore(%3 : memref<!tpu.dma_semaphore, #tpu.memory_space<semaphore_mem>>)
    %c1_i32 = arith.constant 1 : i32
    %c1_i32_4 = arith.constant 1 : i32
    %c0_i32_5 = arith.constant 0 : i32
    %4 = tpu.memref_slice %arg0[%c1_i32_4, %c0_i32_5] : memref<2x1024xf32, #tpu.memory_space<any>> -> memref<1x1024xf32, #tpu.memory_space<any>>
    %c1_i32_6 = arith.constant 1 : i32
    %c0_i32_7 = arith.constant 0 : i32
    %5 = tpu.memref_slice %arg1[%c1_i32_6, %c0_i32_7] : memref<2x1024xf32, #tpu.memory_space<any>> -> memref<1x1024xf32, #tpu.memory_space<any>>
    %6 = tpu.memref_slice %arg2[%c1_i32] : memref<2x!tpu.dma_semaphore, #tpu.memory_space<semaphore_mem>> -> memref<1x!tpu.dma_semaphore, #tpu.memory_space<semaphore_mem>>
    %7 = tpu.memref_squeeze %6 : memref<1x!tpu.dma_semaphore, #tpu.memory_space<semaphore_mem>> -> memref<!tpu.dma_semaphore, #tpu.memory_space<semaphore_mem>>
    tpu.enqueue_dma source(%4 : memref<1x1024xf32, #tpu.memory_space<any>>) target(%5 : memref<1x1024xf32, #tpu.memory_space<any>>) target_semaphore(%7 : memref<!tpu.dma_semaphore, #tpu.memory_space<semaphore_mem>>)
    %c0_i32_8 = arith.constant 0 : i32
    %c0_i32_9 = arith.constant 0 : i32
    %c0_i32_10 = arith.constant 0 : i32
    %8 = tpu.memref_slice %arg0[%c0_i32_9, %c0_i32_10] : memref<2x1024xf32, #tpu.memory_space<any>> -> memref<1x1024xf32, #tpu.memory_space<any>>
    %c0_i32_11 = arith.constant 0 : i32
    %c0_i32_12 = arith.constant 0 : i32
    %9 = tpu.memref_slice %arg1[%c0_i32_11, %c0_i32_12] : memref<2x1024xf32, #tpu.memory_space<any>> -> memref<1x1024xf32, #tpu.memory_space<any>>
    %10 = tpu.memref_slice %arg2[%c0_i32_8] : memref<2x!tpu.dma_semaphore, #tpu.memory_space<semaphore_mem>> -> memref<1x!tpu.dma_semaphore, #tpu.memory_space<semaphore_mem>>
    %11 = tpu.memref_squeeze %10 : memref<1x!tpu.dma_semaphore, #tpu.memory_space<semaphore_mem>> -> memref<!tpu.dma_semaphore, #tpu.memory_space<semaphore_mem>>
    tpu.wait_dma2 semaphore(%11 : memref<!tpu.dma_semaphore, #tpu.memory_space<semaphore_mem>>) src(%8 : memref<1x1024xf32, #tpu.memory_space<any>>) dst(%9 : memref<1x1024xf32, #tpu.memory_space<any>>)
    %c1_i32_13 = arith.constant 1 : i32
    %c1_i32_14 = arith.constant 1 : i32
    %c0_i32_15 = arith.constant 0 : i32
    %12 = tpu.memref_slice %arg0[%c1_i32_14, %c0_i32_15] : memref<2x1024xf32, #tpu.memory_space<any>> -> memref<1x1024xf32, #tpu.memory_space<any>>
    %c1_i32_16 = arith.constant 1 : i32
    %c0_i32_17 = arith.constant 0 : i32
    %13 = tpu.memref_slice %arg1[%c1_i32_16, %c0_i32_17] : memref<2x1024xf32, #tpu.memory_space<any>> -> memref<1x1024xf32, #tpu.memory_space<any>>
    %14 = tpu.memref_slice %arg2[%c1_i32_13] : memref<2x!tpu.dma_semaphore, #tpu.memory_space<semaphore_mem>> -> memref<1x!tpu.dma_semaphore, #tpu.memory_space<semaphore_mem>>
    %15 = tpu.memref_squeeze %14 : memref<1x!tpu.dma_semaphore, #tpu.memory_space<semaphore_mem>> -> memref<!tpu.dma_semaphore, #tpu.memory_space<semaphore_mem>>
    tpu.wait_dma2 semaphore(%15 : memref<!tpu.dma_semaphore, #tpu.memory_space<semaphore_mem>>) src(%12 : memref<1x1024xf32, #tpu.memory_space<any>>) dst(%13 : memref<1x1024xf32, #tpu.memory_space<any>>)
    return
  }
}

</mosaic_0001>

<llo_original>
// kernel: tpu_custom_call.1
$region0: #{tpu_custom_call.1}
  #allocation0 [shape = 'u32[]', space=smem, size = 0x4, offset = 0x4, fixed_abs, tag = 'smem constant byte address 0x4 - core index']
  #allocation1 [shape = 'u32[144,128]{1,0:T(1,128)}', space=vmem, size = 0x12000, scoped, tag = 'internal scratch']
  #allocation2 [shape = 's32[2]{0}', space=sflag, size = 0x8, scoped, tag = 'scratch operand']
  #allocation3 [shape = 's32[]', space=sflag, size = 0x4, offset = 0, fixed_abs, tag = 'sflag constant byte address 0x0 - dummy sync flag']
  #allocation5 [shape = 's32[]', space=sflag, size = 0x4, offset = 0, fixed_abs, tag = 'sflag constant byte address 0x0 - dummy sync flag']
  %s0 = inlined_call_operand.hbm [shape: f32[2,1024], index: 0, kind: input, shape index: {}]
  %s1 = inlined_call_operand.hbm [shape: f32[2,1024], index: 1, kind: output, shape index: {}]
  %s2 = sld [smem:[#allocation0]]
  $region2: #{tpu_custom_call.1} parent=0
    _
  %s4 = ssub.s32 1, %s2
  %s5 = scalar_select 0, %s4, %s2
  $region1: #{tpu_custom_call.1} parent=0
    #allocation4 [shape = 'u32[3]{0}', space=smem, size = 0xc, scoped, tag = 'DMA stride descriptor']
    #allocation6 [shape = 'u32[3]{0}', space=smem, size = 0xc, scoped, tag = 'DMA stride descriptor']
    %s7 = sshll.u32 1, 14
    %s8 = sxor.u32 4294967295, %s7
    %s11 = sshll.u32 3, 24
    %s12 = sxor.u32 4294967295, %s11
    %s13 = sand.u32 0, %s12
    %s15 = sor.u32 %s13, 0
    %18 = sst [smem:[#allocation4]] 32
    %s19 = scalar_lea.smem [#allocation4], 1
    %20 = sst [smem:[%s19]] 32
    %s21 = scalar_lea.smem [#allocation4], 2
    %22 = sst [smem:[%s21]] 1
    %24 = dma.general %s0, 128, %s1, [#allocation2], [#allocation3], [#allocation4], %s15, 0
    %s25 = scalar_lea.hbm %s0, 16
    %s26 = scalar_lea.hbm %s1, 16
    %s27 = scalar_lea.sflag [#allocation2], 1
    %s29 = sshll.u32 1, 14
    %s30 = sxor.u32 4294967295, %s29
    %s33 = sshll.u32 3, 24
    %s34 = sxor.u32 4294967295, %s33
    %s35 = sand.u32 0, %s34
    %s37 = sor.u32 %s35, 0
    %40 = sst [smem:[#allocation6]] 32
    %s41 = scalar_lea.smem [#allocation6], 1
    %42 = sst [smem:[%s41]] 32
    %s43 = scalar_lea.smem [#allocation6], 2
    %44 = sst [smem:[%s43]] 1
    %46 = dma.general %s25, 128, %s26, %s27, [#allocation5], [#allocation6], %s37, 0
    %s47 = smul.u32 1, 8
    %s48 = sshll.u32 %s47, 4
    %49 = dma.done [#allocation2], %s48
    %s50 = sshll.u32 %s47, 4
    %51 = dma.done %s27, %s50
  %52 = vsyncmov [#allocation2]
  %s53 = vpop.sfrf %52
  %p54 = scmp.eq.s32.totalorder %s53, 0
  %p55 = pneg %p54
  %57 = shalt.err (%p55)
  %s58 = scalar_lea.sflag [#allocation2], 1
  %59 = vsyncmov %s58
  %s60 = vpop.sfrf %59
  %p61 = scmp.eq.s32.totalorder %s60, 0
  %p62 = pneg %p61
  %64 = shalt.err (%p62)

</llo_original>
